<compile_context>
chip_gen: v7x
topology: tpu7x:2x2x1
jax: 0.10.0
libtpu: 0.0.40
codegen_flags: <defaults>
</compile_context>

<pallas_src>
import functools

import jax
import jax.numpy as jnp
from jax import lax
from jax.experimental import pallas as pl
from jax.experimental.pallas import tpu as pltpu


def gem_kernel(p_ref, x_ref, o_ref, *, eps, inv_hw, low_precision_pow):
    """One (TM, H*W) row tile -> (TM, 1) per-row mean of clamp(x, eps)**p."""
    p = p_ref[0]

    # clamp(min=eps) BEFORE the pow so garbage rows of a partial last tile can
    # never feed log() with non-positive values.
    xc = jnp.maximum(x_ref[...].astype(jnp.float32), eps)

    def pow3(v):
        # default p == 3: two VPU multiplies per element, no EUP work.
        return v * v * v

    def pow_generic(v):
        # trained-p hot path: exp(p * log(v)).
        if low_precision_pow:
            # bf16 transcendentals (bf16 EUP on v6e/v7x); the input was
            # already bf16 so the extra error is ~the input precision.
            vb = v.astype(jnp.bfloat16)
            return jnp.exp(jnp.log(vb) * p.astype(jnp.bfloat16)).astype(jnp.float32)
        return jnp.exp(jnp.log(v) * p)

    xp = lax.cond(p == 3.0, pow3, pow_generic, xc)

    # row mean over the full spatial extent; 1/(H*W) hoisted to a scalar.
    # (Mosaic lowers the lane reduce as VPU adds over the HW/128 lane vregs
    # plus one cross-lane XLU reduce.)
    o_ref[...] = (jnp.sum(xp, axis=-1, keepdims=True) * inv_hw).astype(o_ref.dtype)


def gem_forward(x, p, eps=1e-6):
    """x: (B, C, H, W), p: (1,) float parameter. Returns (B, C, 1, 1)."""
    B, C, H, W = x.shape
    BC = B * C
    HW = H * W
    x2d = x.reshape(BC, HW)
    p32 = p.reshape(-1).astype(jnp.float32)
    itemsize = x2d.dtype.itemsize

    # ---- row-tile sizing (dtype- and VMEM-aware) ----
    hw_pad = pl.cdiv(HW, 128) * 128           # lane padding of the last dim
    row_in_bytes = hw_pad * itemsize
    # per-row VMEM footprint: 2x double-buffered input + ~3 live f32
    # elementwise temporaries + 2x lane-padded output row.
    row_vmem_bytes = 2 * row_in_bytes + 3 * hw_pad * 4 + 2 * 128 * 4

    target_tile_bytes = 4 * 1024 * 1024       # ~85%+ of HBM roofline per tile
    vmem_budget = 32 * 1024 * 1024            # headroom inside v7x's 64 MiB

    tm = min(max(1, target_tile_bytes // row_in_bytes),
             max(1, vmem_budget // row_vmem_bytes))
    tm = max(8, (tm // 8) * 8)
    if BC >= 16:
        # keep >= 2 grid steps so the "parallel" axis can shard across both
        # v7x TensorCores instead of collapsing to a single-step grid.
        tm = min(tm, pl.cdiv(pl.cdiv(BC, 2), 8) * 8)
    if tm >= BC:
        tm = BC                               # full-extent row block is legal
    grid = (pl.cdiv(BC, tm),)

    vmem_est = tm * row_vmem_bytes + (1 << 20)
    vmem_limit = int(min(max(vmem_est, 32 * 1024 * 1024), 48 * 1024 * 1024))

    low_precision_pow = bool(x2d.dtype == jnp.bfloat16)

    cost = pl.CostEstimate(
        flops=3 * BC * HW,
        transcendentals=2 * BC * HW,            # generic-p path (the hot one)
        bytes_accessed=BC * HW * itemsize + BC * 4,
    )

    means = pl.pallas_call(
        functools.partial(
            gem_kernel,
            eps=float(eps),
            inv_hw=1.0 / float(HW),
            low_precision_pow=low_precision_pow,
        ),
        out_shape=jax.ShapeDtypeStruct((BC, 1), jnp.float32),
        grid_spec=pltpu.PrefetchScalarGridSpec(
            num_scalar_prefetch=1,
            grid=grid,
            in_specs=[
                pl.BlockSpec((tm, HW), lambda i, p_ref: (i, 0)),   # x row tile
            ],
            out_specs=pl.BlockSpec((tm, 1), lambda i, p_ref: (i, 0)),
        ),
        compiler_params=pltpu.CompilerParams(
            dimension_semantics=("parallel",),
            vmem_limit_bytes=vmem_limit,
        ),
        cost_estimate=cost,
    )(p32, x2d)

    # final (mean)**(1/p) on the tiny (B*C,) result: lane-dense in XLA,
    # negligible HBM traffic, and frees the kernel's EUP slot.
    y = means[:, 0] ** (1.0 / p32[0])
    return y.astype(x.dtype).reshape(B, C, 1, 1)


def gem_reference(x, p, eps=1e-6):
    # pure-JAX reference for a sanity check
    xc = jnp.maximum(x.astype(jnp.float32), eps)
    xp = xc ** p[0]
    m = jnp.mean(xp, axis=(-2, -1), keepdims=True)
    return (m ** (1.0 / p[0])).astype(x.dtype)


if __name__ == "__main__":
    key = jax.random.PRNGKey(0)
    B, C, H, W = 2, 4, 16, 16
    x = jax.random.uniform(key, (B, C, H, W), dtype=jnp.float32)
    eps = 1e-6

    # default init matching nn.Parameter(torch.ones(1) * 3) -> VPU fast path
    p3 = jnp.ones((1,), dtype=jnp.float32) * 3.0
    y3 = jax.block_until_ready(gem_forward(x, p3, eps))
    y3_ref = gem_reference(x, p3, eps)
    assert y3.shape == (B, C, 1, 1)
    assert jnp.allclose(y3, y3_ref, rtol=1e-4, atol=1e-6), "mismatch vs reference (p=3)"

    # trained / non-integer p -> generic f32 exp(p*log(x)) path
    p25 = jnp.ones((1,), dtype=jnp.float32) * 2.5
    y25 = jax.block_until_ready(gem_forward(x, p25, eps))
    y25_ref = gem_reference(x, p25, eps)
    assert jnp.allclose(y25, y25_ref, rtol=1e-4, atol=1e-6), "mismatch vs reference (p=2.5)"

    # bf16 input -> bf16-EUP generic path (looser tol: bf16 transcendentals)
    xb = x.astype(jnp.bfloat16)
    yb = jax.block_until_ready(gem_forward(xb, p25, eps))
    yb_ref = gem_reference(xb, p25, eps)
    assert jnp.allclose(yb.astype(jnp.float32), yb_ref.astype(jnp.float32),
                        rtol=3e-2, atol=1e-3), "mismatch vs reference (bf16, p=2.5)"

    print("KERNEL_OK")
</pallas_src>

<mosaic_0001>
module attributes {stable_mosaic.version = 11 : i64} {
  func.func @gem_kernel(%arg0: i32, %arg1: memref<1xf32, #tpu.memory_space<smem>>, %arg2: memref<8x256xf32, #tpu.memory_space<vmem>>, %arg3: memref<8x1xf32, #tpu.memory_space<vmem>>) attributes {dimension_semantics = [#tpu.dimension_semantics<parallel>], iteration_bounds = array<i64: 1>, scalar_prefetch = 1 : i64, scratch_operands = 0 : i64, tpu.core_type = #tpu.core_type<tc>, window_params = [{transform_indices = @transform_0, window_bounds = array<i64: 8, 256>}, {transform_indices = @transform_1, window_bounds = array<i64: 8, 1>}]} {
    %c0 = arith.constant 0 : index
    %0 = memref.load %arg1[%c0] : memref<1xf32, #tpu.memory_space<smem>>
    %c0_0 = arith.constant 0 : index
    %c0_1 = arith.constant 0 : index
    %1 = vector.load %arg2[%c0_0, %c0_1] : memref<8x256xf32, #tpu.memory_space<vmem>>, vector<8x256xf32>
    %cst = arith.constant 9.99999997E-7 : f32
    %2 = vector.broadcast %cst : f32 to vector<8x256xf32>
    %3 = arith.maximumf %1, %2 : vector<8x256xf32>
    %cst_2 = arith.constant 3.000000e+00 : f32
    %4 = arith.cmpf oeq, %0, %cst_2 : f32
    %5 = arith.extui %4 : i1 to i32
    %c0_i32 = arith.constant 0 : i32
    %6 = arith.cmpi ne, %5, %c0_i32 : i32
    %7 = scf.if %6 -> (vector<8x256xf32>) {
      %13 = arith.mulf %3, %3 : vector<8x256xf32>
      %14 = arith.mulf %13, %3 : vector<8x256xf32>
      scf.yield %14 : vector<8x256xf32>
    } else {
      %13 = math.log %3 : vector<8x256xf32>
      %14 = vector.broadcast %0 : f32 to vector<8x256xf32>
      %15 = arith.mulf %13, %14 : vector<8x256xf32>
      %16 = math.exp %15 : vector<8x256xf32>
      scf.yield %16 : vector<8x256xf32>
    }
    %cst_3 = arith.constant dense<0.000000e+00> : vector<8xf32>
    %8 = vector.multi_reduction <add>, %7, %cst_3 [1] : vector<8x256xf32> to vector<8xf32>
    %9 = vector.shape_cast %8 : vector<8xf32> to vector<8x1xf32>
    %cst_4 = arith.constant 3.906250e-03 : f32
    %10 = vector.broadcast %cst_4 : f32 to vector<8x1xf32>
    %11 = arith.mulf %9, %10 : vector<8x1xf32>
    %c0_5 = arith.constant 0 : index
    %c0_6 = arith.constant 0 : index
    %12 = vector.load %arg3[%c0_5, %c0_6] : memref<8x1xf32, #tpu.memory_space<vmem>>, vector<8x1xf32>
    tpu.vector_store %arg3[%c0_5, %c0_6], %11 {strides = array<i32>} : memref<8x1xf32, #tpu.memory_space<vmem>>, vector<8x1xf32>,
    return
  }
  func.func @transform_0(%arg0: i32, %arg1: memref<1xf32, #tpu.memory_space<smem>>) -> (i32, i32) {
    %c0_i32 = arith.constant 0 : i32
    %c0_i32_0 = arith.constant 0 : i32
    return %arg0, %c0_i32 : i32, i32
  }
  func.func @transform_1(%arg0: i32, %arg1: memref<1xf32, #tpu.memory_space<smem>>) -> (i32, i32) {
    %c0_i32 = arith.constant 0 : i32
    %c0_i32_0 = arith.constant 0 : i32
    return %arg0, %c0_i32 : i32, i32
  }
}

</mosaic_0001>

<llo_original>
// kernel: tpu_custom_call.1
$region0: #{tpu_custom_call.1}
  #allocation0 [shape = 'u32[]', space=smem, size = 0x4, offset = 0x4, fixed_abs, tag = 'smem constant byte address 0x4 - core index']
  #allocation1 [shape = 'u32[144,128]{1,0:T(1,128)}', space=vmem, size = 0x12000, scoped, tag = 'internal scratch']
  #allocation2 [shape = 's32[1]{0}', space=sflag, size = 0x4, scoped, tag = 'scoped memory for tpu_custom_call.1']
  #allocation3 [shape = 'f32[1]{0:T(128)S(6)}', space=smem, size = 0x200, scoped, tag = 'prefetched SMEM operand 0']
  %s0 = inlined_call_operand.<no memory space> [shape: f32[1], index: 0, kind: input, shape index: {}]
  %s1 = inlined_call_operand.hbm [shape: f32[8,256], index: 1, kind: input, shape index: {}]
  %s2 = inlined_call_operand.vmem [shape: f32[8,1], index: 2, kind: output, shape index: {}]
  %s3 = sld [smem:[#allocation0]]
  $region26: #{tpu_custom_call.1} parent=0
    _
  %s5 = ssub.s32 1, %s3
  %s6 = scalar_select 0, %s5, %s3
  %7 = sst [smem:[#allocation3]] %s0
  $region1: #{tpu_custom_call.1} parent=0
    #allocation4 [shape = 'u8[8192]{0}', space=vmem, size = 0x2000, scoped, tag = 'input window, operand 1, single buffered']
    #allocation5 [shape = 's32[1]{0}', space=sflag, size = 0x4, scoped, tag = 'scoped memory for tpu_custom_call.1']
    %8 = vsyncpa [#allocation5], 0
    // Predicated region
    $region2: #{tpu_custom_call.1} parent=1 // pred_check
      _
    $region3: #{tpu_custom_call.1} parent=1 // pred_check_branch
      %10 = sbr.rel (0) target = $region5
    $region4: #{tpu_custom_call.1} parent=1 // pred_region
      %s12 = ssub.s32 256, 256
      %13 = vsyncadd [#allocation5], %s12
      %s15 = sshll.u32 [#allocation4], 4
      %s16 = int_to_ptr.vmem [resolvable:$true] %s15
      %18 = dma.hbm_to_vmem [thread:$0]  %s1, 256, %s16, [#allocation5]
    $region5: #{tpu_custom_call.1} parent=1 // pred_fallthru
      _
    // Predicated region
    $region6: #{tpu_custom_call.1} parent=1 // pred_check
      _
    $region7: #{tpu_custom_call.1} parent=1 // pred_check_branch
      %20 = sbr.rel (0) target = $region9
    $region8: #{tpu_custom_call.1} parent=1 // pred_region
      %21 = dma.done [#allocation5], 256
    $region9: #{tpu_custom_call.1} parent=1 // pred_fallthru
      _
    %s22 = sld [smem:[#allocation3]]
    %v23 = vld [vmem:[#allocation4] sm:$0xff]
    %v24 = vld [vmem:[#allocation4 + $0x8] sm:$0xff]
    %v25 = vmax.f32 %v23, 1e-06
    %v26 = vmax.f32 %v24, 1e-06
    %p27 = scmp.eq.f32.partialorder %s22, 3.0
    // Predicated region
    $region10: #{tpu_custom_call.1} parent=1 // pred_check
      %p28 = pneg %p27
    $region11: #{tpu_custom_call.1} parent=1 // pred_check_branch
      %30 = sbr.rel (%p28) target = $region13
    $region12: #{tpu_custom_call.1} parent=1 // pred_region
      %v31 = vmul.f32 %v25, %v25
      %v32 = vmul.f32 %v26, %v26
      %v33 = vmul.f32 %v31, %v25
      %v34 = vmul.f32 %v32, %v26
    $region13: #{tpu_custom_call.1} parent=1 // pred_fallthru
      %v35 = vphi 0, %v33
      %v36 = vphi 0, %v34
    %p37 = pneg %p27
    // Predicated region
    $region14: #{tpu_custom_call.1} parent=1 // pred_check
      _
    $region15: #{tpu_custom_call.1} parent=1 // pred_check_branch
      %39 = sbr.rel (%p27) target = $region17
    $region16: #{tpu_custom_call.1} parent=1 // pred_region
      %v40 = vlog2.pop %v25
      %v41 = vmul.f32 %v40, 0.6931472
      %v42 = vlog2.pop %v26
      %v43 = vmul.f32 %v42, 0.6931472
      %v44 = vstv %s22
      %v45 = vmul.f32 %v41, %v44
      %v46 = vmul.f32 %v43, %v44
      %v47 = vmul.f32 %v45, 1.442695
      %v48 = vpow.pop %v47
      %v49 = vmul.f32 %v46, 1.442695
      %v50 = vpow.pop %v49
    $region17: #{tpu_custom_call.1} parent=1 // pred_fallthru
      %v51 = vphi %v35, %v48
      %v52 = vphi %v36, %v50
    %v53 = vadd.f32 %v51, %v52
    %54 = vadd.xlane.f32.xlu0 %v53
    %v55 = vpop.xlane.xlu0 %54
    %v56 = vmul.f32 %v55, 0.00390625
    %vm57 = vcmask 7168
    %58 = vst.msk [vmem:[%s2] sm:$0xff] %vm57, %v56
    // Predicated region
    $region18: #{tpu_custom_call.1} parent=1 // pred_check
      _
    $region19: #{tpu_custom_call.1} parent=1 // pred_check_branch
      %60 = sbr.rel (0) target = $region21
    $region20: #{tpu_custom_call.1} parent=1 // pred_region
      _
    $region21: #{tpu_custom_call.1} parent=1 // pred_fallthru
      _
    // Predicated region
    $region22: #{tpu_custom_call.1} parent=1 // pred_check
      _
    $region23: #{tpu_custom_call.1} parent=1 // pred_check_branch
      %62 = sbr.rel (0) target = $region25
    $region24: #{tpu_custom_call.1} parent=1 // pred_region
      _
    $region25: #{tpu_custom_call.1} parent=1 // pred_fallthru
      _
    %63 = vsyncpa [#allocation5], 1

</llo_original>
